<compile_context>
chip_gen: v7x
topology: tpu7x:2x2x1
jax: 0.10.0
libtpu: 0.0.40
codegen_flags: <defaults>
</compile_context>

<pallas_src>
import functools

import jax
import jax.numpy as jnp
from jax.experimental import pallas as pl
from jax.experimental.pallas import tpu as pltpu

_LN_EPS = 1e-5  # torch.nn.LayerNorm default

_VMEM_LIMIT_BYTES = 48 * 1024 * 1024   # < v7x 64 MiB physical, > v5e 16 MiB scoped
_VMEM_TILE_BUDGET = 36 * 1024 * 1024   # headroom under the limit when picking tiles


def _round_up(a, b):
    return (a + b - 1) // b * b


def _pick_row_tile(tm_req, m, d, x_itemsize, w_itemsize):
    """Row tile: multiple of 8, fits the VMEM budget, keeps grid >= 2 if possible."""
    tm = min(_round_up(tm_req, 8), _round_up(m, 8))

    def fits(t):
        need = 2 * 2 * t * d * x_itemsize   # double-buffered x-in + out tiles
        need += 2 * d * d * w_itemsize      # double-buffered fused weight
        need += 4 * t * d * 4               # rough in-kernel f32 temporaries
        return need <= _VMEM_TILE_BUDGET

    while tm > 8 and not fits(tm):
        tm = _round_up(tm // 2, 8)

    # Don't collapse the parallel grid to a single step (leaves a TC idle on v7x).
    if _round_up(m, tm) // tm < 2 and tm > 8:
        tm = _round_up(tm // 2, 8)
    return tm


def _sublayer_connection_kernel(x_ref, w_ref, b_ref, o_ref):
    # x_ref: (tm, D) row tile; w_ref: (D, D) fused weight; b_ref: (1, D) fused bias.
    x = x_ref[...].astype(jnp.float32)

    # LayerNorm statistics over d_model (biased variance, like torch), f32.
    mean = jnp.mean(x, axis=-1, keepdims=True)
    centered = x - mean
    var = jnp.mean(centered * centered, axis=-1, keepdims=True)
    z = centered * jax.lax.rsqrt(var + _LN_EPS)   # gamma/beta folded into W', b'

    # Sublayer: Linear on the MXU (operands in w_ref.dtype, f32 accumulation).
    y = jnp.dot(z.astype(w_ref.dtype), w_ref[...],
                preferred_element_type=jnp.float32)
    y = y + b_ref[...]

    # TODO(synk): dropout is identity here (eval mode); training-mode dropout
    # would need pltpu.prng_seed + pltpu.stateful_bernoulli.

    # Residual connection.
    o_ref[...] = (x + y).astype(o_ref.dtype)


@functools.partial(jax.jit, static_argnames=("tm", "matmul_in_bf16"))
def sublayer_connection(x, gamma, beta, w, b, *, tm=1024, matmul_in_bf16=None):
    """Fused  x + Linear(LayerNorm(x))  for x of shape (batch, N, T, d_model).

    NOTE: `w` must be in (in_features, out_features) layout, i.e. pass the
    TRANSPOSE of a PyTorch nn.Linear.weight (which is stored (out, in)).
    gamma/beta are the nn.LayerNorm affine parameters.
    """
    batch, n, t, d = x.shape
    m = batch * n * t

    if matmul_in_bf16 is None:
        matmul_in_bf16 = d >= 256          # MXU-leaning regime on v6e/v7x
    mm_dtype = jnp.bfloat16 if matmul_in_bf16 else jnp.float32

    # Fold LayerNorm's affine into the Linear sublayer (host-side, once):
    #   (z*gamma + beta) @ W + b == z @ (diag(gamma) @ W) + (beta @ W + b)
    gamma_f = gamma.astype(jnp.float32)
    beta_f = beta.astype(jnp.float32)
    w_f = w.astype(jnp.float32)
    w_fused = (gamma_f[:, None] * w_f).astype(mm_dtype)              # (d, d)
    b_fused = (beta_f @ w_f + b.astype(jnp.float32)).reshape(1, d)   # (1, d) f32

    tm_eff = _pick_row_tile(tm, m, d,
                            jnp.dtype(x.dtype).itemsize,
                            jnp.dtype(mm_dtype).itemsize)

    x2d = x.reshape(m, d)
    m_padded = _round_up(m, tm_eff)
    if m_padded != m:
        # Zero rows normalize to 0 and only pick up b_fused; sliced off below.
        x2d = jnp.pad(x2d, ((0, m_padded - m), (0, 0)))

    # NOTE: for d_model < 128 the output stores are masked (vst.msk); if that
    # ever matters, pad d_model to a multiple of 128 in a wrapper.  The demo
    # below uses a lane-dense d_model = 128.
    out2d = pl.pallas_call(
        _sublayer_connection_kernel,
        out_shape=jax.ShapeDtypeStruct((m_padded, d), x.dtype),
        grid_spec=pl.GridSpec(
            grid=(m_padded // tm_eff,),
            in_specs=[
                pl.BlockSpec((tm_eff, d), lambda i: (i, 0)),  # x rows (streamed)
                pl.BlockSpec((d, d), lambda i: (0, 0)),       # fused weight
                pl.BlockSpec((1, d), lambda i: (0, 0)),       # fused bias
            ],
            out_specs=pl.BlockSpec((tm_eff, d), lambda i: (i, 0)),
        ),
        compiler_params=pltpu.CompilerParams(
            dimension_semantics=("parallel",),   # shard row tiles across TCs (v7x)
            vmem_limit_bytes=_VMEM_LIMIT_BYTES,
        ),
    )(x2d, w_fused, b_fused)

    if m_padded != m:
        out2d = out2d[:m]
    return out2d.reshape(batch, n, t, d)


if __name__ == "__main__":
    # Small shapes consistent with the module's (batch, N, T, d_model) input.
    batch, n_nodes, seq_t, d_model = 2, 4, 8, 128

    key = jax.random.PRNGKey(0)
    kx, kw, kb, kg, kbe = jax.random.split(key, 5)

    x = jax.random.normal(kx, (batch, n_nodes, seq_t, d_model), dtype=jnp.float32)

    # Deterministic synthetic parameters (not a checkpoint).
    gamma = 1.0 + 0.1 * jax.random.normal(kg, (d_model,), dtype=jnp.float32)
    beta = 0.05 * jax.random.normal(kbe, (d_model,), dtype=jnp.float32)
    # PyTorch layout: nn.Linear.weight is (out_features, in_features).
    w_torch = jax.random.normal(kw, (d_model, d_model), dtype=jnp.float32) * 0.05
    b = jax.random.normal(kb, (d_model,), dtype=jnp.float32) * 0.01

    # Pass the transposed (in, out) weight, as a real checkpoint load would.
    out = sublayer_connection(x, gamma, beta, w_torch.T, b)
    out = jax.block_until_ready(out)

    # Pure-JAX reference: x + Linear(LayerNorm(x))  (dropout = identity).
    mean = jnp.mean(x, axis=-1, keepdims=True)
    var = jnp.mean((x - mean) ** 2, axis=-1, keepdims=True)
    xn = (x - mean) / jnp.sqrt(var + _LN_EPS) * gamma + beta
    ref = x + (jnp.einsum("bntd,od->bnto", xn, w_torch,
                          precision=jax.lax.Precision.HIGHEST) + b)

    assert out.shape == x.shape and out.dtype == x.dtype
    assert jnp.allclose(out, ref, atol=2e-4, rtol=2e-4), "mismatch vs reference"

    print("KERNEL_OK")
</pallas_src>

<mosaic_0001>
module attributes {stable_mosaic.version = 11 : i64} {
  func.func @_sublayer_connection_kernel(%arg0: i32, %arg1: memref<32x128xf32, #tpu.memory_space<vmem>>, %arg2: memref<128x128xf32, #tpu.memory_space<vmem>>, %arg3: memref<1x128xf32, #tpu.memory_space<vmem>>, %arg4: memref<32x128xf32, #tpu.memory_space<vmem>>) attributes {dimension_semantics = [#tpu.dimension_semantics<parallel>], iteration_bounds = array<i64: 2>, scalar_prefetch = 0 : i64, scratch_operands = 0 : i64, tpu.core_type = #tpu.core_type<tc>, window_params = [{transform_indices = @transform_0, window_bounds = array<i64: 32, 128>}, {pipeline_mode = #tpu.pipeline_mode<synchronous>, transform_indices = @transform_1, window_bounds = array<i64: 128, 128>}, {pipeline_mode = #tpu.pipeline_mode<synchronous>, transform_indices = @transform_2, window_bounds = array<i64: 1, 128>}, {transform_indices = @transform_3, window_bounds = array<i64: 32, 128>}]} {
    %c0 = arith.constant 0 : index
    %c0_0 = arith.constant 0 : index
    %0 = vector.load %arg1[%c0, %c0_0] : memref<32x128xf32, #tpu.memory_space<vmem>>, vector<32x128xf32>
    %cst = arith.constant dense<0.000000e+00> : vector<32xf32>
    %1 = vector.multi_reduction <add>, %0, %cst [1] : vector<32x128xf32> to vector<32xf32>
    %2 = vector.shape_cast %1 : vector<32xf32> to vector<32x1xf32>
    %cst_1 = arith.constant 1.280000e+02 : f32
    %3 = vector.broadcast %cst_1 : f32 to vector<32x1xf32>
    %4 = arith.divf %2, %3 : vector<32x1xf32>
    %5 = vector.broadcast %4 : vector<32x1xf32> to vector<32x128xf32>
    %6 = arith.subf %0, %5 : vector<32x128xf32>
    %7 = arith.mulf %6, %6 : vector<32x128xf32>
    %cst_2 = arith.constant dense<0.000000e+00> : vector<32xf32>
    %8 = vector.multi_reduction <add>, %7, %cst_2 [1] : vector<32x128xf32> to vector<32xf32>
    %9 = vector.shape_cast %8 : vector<32xf32> to vector<32x1xf32>
    %cst_3 = arith.constant 1.280000e+02 : f32
    %10 = vector.broadcast %cst_3 : f32 to vector<32x1xf32>
    %11 = arith.divf %9, %10 : vector<32x1xf32>
    %cst_4 = arith.constant 9.99999974E-6 : f32
    %12 = vector.broadcast %cst_4 : f32 to vector<32x1xf32>
    %13 = arith.addf %11, %12 : vector<32x1xf32>
    %14 = math.rsqrt %13 : vector<32x1xf32>
    %15 = vector.broadcast %14 : vector<32x1xf32> to vector<32x128xf32>
    %16 = arith.mulf %6, %15 : vector<32x128xf32>
    %c0_5 = arith.constant 0 : index
    %c0_6 = arith.constant 0 : index
    %17 = vector.load %arg2[%c0_5, %c0_6] : memref<128x128xf32, #tpu.memory_space<vmem>>, vector<128x128xf32>
    %cst_7 = arith.constant dense<0.000000e+00> : vector<32x128xf32>
    %18 = tpu.matmul %16, %17, %cst_7 {dimension_numbers = #tpu.dot_dimension_numbers<[1], [0], [0], [1], [0, 0, 1, 1], [], []>} : vector<32x128xf32>, vector<128x128xf32>, vector<32x128xf32> -> vector<32x128xf32>
    %c0_8 = arith.constant 0 : index
    %c0_9 = arith.constant 0 : index
    %19 = vector.load %arg3[%c0_8, %c0_9] : memref<1x128xf32, #tpu.memory_space<vmem>>, vector<1x128xf32>
    %20 = vector.broadcast %19 : vector<1x128xf32> to vector<32x128xf32>
    %21 = arith.addf %18, %20 : vector<32x128xf32>
    %22 = arith.addf %0, %21 : vector<32x128xf32>
    %c0_10 = arith.constant 0 : index
    %c0_11 = arith.constant 0 : index
    %23 = vector.load %arg4[%c0_10, %c0_11] : memref<32x128xf32, #tpu.memory_space<vmem>>, vector<32x128xf32>
    tpu.vector_store %arg4[%c0_10, %c0_11], %22 {strides = array<i32>} : memref<32x128xf32, #tpu.memory_space<vmem>>, vector<32x128xf32>,
    return
  }
  func.func @transform_0(%arg0: i32) -> (i32, i32) {
    %c0_i32 = arith.constant 0 : i32
    %c0_i32_0 = arith.constant 0 : i32
    return %arg0, %c0_i32 : i32, i32
  }
  func.func @transform_1(%arg0: i32) -> (i32, i32) {
    %c0_i32 = arith.constant 0 : i32
    %c0_i32_0 = arith.constant 0 : i32
    %c0_i32_1 = arith.constant 0 : i32
    return %c0_i32, %c0_i32_0 : i32, i32
  }
  func.func @transform_2(%arg0: i32) -> (i32, i32) {
    %c0_i32 = arith.constant 0 : i32
    %c0_i32_0 = arith.constant 0 : i32
    %c0_i32_1 = arith.constant 0 : i32
    return %c0_i32, %c0_i32_0 : i32, i32
  }
  func.func @transform_3(%arg0: i32) -> (i32, i32) {
    %c0_i32 = arith.constant 0 : i32
    %c0_i32_0 = arith.constant 0 : i32
    return %arg0, %c0_i32 : i32, i32
  }
}

</mosaic_0001>

<llo_original>
// kernel: sublayer_connection.1
$region0: #{sublayer_connection.1}
  #allocation0 [shape = 'u32[]', space=smem, size = 0x4, offset = 0x4, fixed_abs, tag = 'smem constant byte address 0x4 - core index']
  #allocation1 [shape = 'u32[144,128]{1,0:T(1,128)}', space=vmem, size = 0x12000, scoped, tag = 'internal scratch']
  %s0 = inlined_call_operand.vmem [shape: f32[64,128], index: 0, kind: input, shape index: {}]
  %s1 = inlined_call_operand.vmem [shape: f32[128,128], index: 1, kind: input, shape index: {}]
  %s2 = inlined_call_operand.vmem [shape: f32[1,128], index: 2, kind: input, shape index: {}]
  %s3 = inlined_call_operand.hbm [shape: f32[64,128], index: 3, kind: output, shape index: {}]
  %s4 = sld [smem:[#allocation0]]
  $region45: #{sublayer_connection.1} parent=0
    _
  %s6 = ssub.s32 1, %s4
  %s7 = scalar_select 0, %s6, %s4
  $region1: #{sublayer_connection.1} parent=0
    #allocation2 [shape = 'u8[32768]{0}', space=vmem, size = 0x8000, scoped, tag = 'output window, operand 0']
    #allocation3 [shape = 's32[2]{0}', space=sflag, size = 0x8, scoped, tag = 'scoped memory for sublayer_connection.1']
    %8 = vsyncpa [#allocation3], 0
    %s9 = scalar_lea.sflag [#allocation3], 1
    %10 = vsyncpa %s9, 0
    loop: start=0, step=1, limit=4
    $region2: #{sublayer_connection.1} parent=1 // loop_pre_header
      _
    $region3: #{sublayer_connection.1} parent=1 // loop_header
      %s12 = sphi 0, %s16
      %p13 = scmp.ge.s32.totalorder %s12, 4
      %s22 = sphi 0, %s24
      %s25 = sphi 0, %s22
      %s26 = sphi 0, %s25
      %s42 = sphi 0, %s26
      %s46 = sphi 0, %s46
      %s48 = sphi 0, %s46
      %s49 = sphi 0, %s48
      %s63 = sphi 0, %s49
      %s67 = sphi 0, %s67
      %s69 = sphi 0, %s67
      %s70 = sphi 0, %s69
      %s84 = sphi 0, %s70
      %s90 = sphi 0, %s92
      %s93 = sphi 0, %s90
      %s94 = sphi 0, %s93
      %s110 = sphi 0, %s94
    $region4: #{sublayer_connection.1} parent=1 // loop_header_branch
      %15 = sbr.rel (%p13) target = $region8
    $region5: #{sublayer_connection.1} parent=1 // loop_body
      %s17 = ssub.s32 %s12, 1
      %s18 = ssub.s32 %s12, 2
      %s19 = sadd.s32 %s12, 1
      %s20 = ssub.s32 %s12, %s19
      %p21 = scmp.eq.s32.totalorder %s20, 0
      %s23 = sadd.s32 %s22, 1
      %s24 = scalar_select %p21, %s22, %s23
      %p27 = pneg %p21
      %p28 = scmp.eq.s32.totalorder %s12, 1
      %p29 = por %p27, %p28
      %p30 = scmp.ne.s32.totalorder %s22, %s25
      %p31 = scmp.eq.s32.totalorder %s12, 0
      %p32 = por %p30, %p31
      %p33 = scmp.ne.s32.totalorder %s22, %s25
      %p34 = scmp.eq.s32.totalorder %s17, 1
      %p35 = por %p33, %p34
      %p36 = scmp.ne.s32.totalorder %s25, %s26
      %p37 = scmp.eq.s32.totalorder %s17, 0
      %p38 = por %p36, %p37
      %p39 = scmp.ne.s32.totalorder %s25, %s26
      %p40 = scmp.eq.s32.totalorder %s18, 1
      %p41 = por %p39, %p40
      %p43 = scmp.ne.s32.totalorder %s26, %s42
      %p44 = scmp.eq.s32.totalorder %s18, 0
      %p45 = por %p43, %p44
      %s47 = sadd.s32 %s46, 1
      %p50 = scmp.eq.s32.totalorder %s12, 1
      %p51 = scmp.ne.s32.totalorder %s46, %s48
      %p52 = scmp.eq.s32.totalorder %s12, 0
      %p53 = por %p51, %p52
      %p54 = scmp.ne.s32.totalorder %s46, %s48
      %p55 = scmp.eq.s32.totalorder %s17, 1
      %p56 = por %p54, %p55
      %p57 = scmp.ne.s32.totalorder %s48, %s49
      %p58 = scmp.eq.s32.totalorder %s17, 0
      %p59 = por %p57, %p58
      %p60 = scmp.ne.s32.totalorder %s48, %s49
      %p61 = scmp.eq.s32.totalorder %s18, 1
      %p62 = por %p60, %p61
      %p64 = scmp.ne.s32.totalorder %s49, %s63
      %p65 = scmp.eq.s32.totalorder %s18, 0
      %p66 = por %p64, %p65
      %s68 = sadd.s32 %s67, 1
      %p71 = scmp.eq.s32.totalorder %s12, 1
      %p72 = scmp.ne.s32.totalorder %s67, %s69
      %p73 = scmp.eq.s32.totalorder %s12, 0
      %p74 = por %p72, %p73
      %p75 = scmp.ne.s32.totalorder %s67, %s69
      %p76 = scmp.eq.s32.totalorder %s17, 1
      %p77 = por %p75, %p76
      %p78 = scmp.ne.s32.totalorder %s69, %s70
      %p79 = scmp.eq.s32.totalorder %s17, 0
      %p80 = por %p78, %p79
      %p81 = scmp.ne.s32.totalorder %s69, %s70
      %p82 = scmp.eq.s32.totalorder %s18, 1
      %p83 = por %p81, %p82
      %p85 = scmp.ne.s32.totalorder %s70, %s84
      %p86 = scmp.eq.s32.totalorder %s18, 0
      %p87 = por %p85, %p86
      %s88 = ssub.s32 %s12, %s19
      %p89 = scmp.eq.s32.totalorder %s88, 0
      %s91 = sadd.s32 %s90, 1
      %s92 = scalar_select %p89, %s90, %s91
      %p95 = pneg %p89
      %p96 = scmp.eq.s32.totalorder %s12, 1
      %p97 = por %p95, %p96
      %p98 = scmp.ne.s32.totalorder %s90, %s93
      %p99 = scmp.eq.s32.totalorder %s12, 0
      %p100 = por %p98, %p99
      %p101 = scmp.ne.s32.totalorder %s90, %s93
      %p102 = scmp.eq.s32.totalorder %s17, 1
      %p103 = por %p101, %p102
      %p104 = scmp.ne.s32.totalorder %s93, %s94
      %p105 = scmp.eq.s32.totalorder %s17, 0
      %p106 = por %p104, %p105
      %p107 = scmp.ne.s32.totalorder %s93, %s94
      %p108 = scmp.eq.s32.totalorder %s18, 1
      %p109 = por %p107, %p108
      %p111 = scmp.ne.s32.totalorder %s94, %s110
      %p112 = scmp.eq.s32.totalorder %s18, 0
      %p113 = por %p111, %p112
      %p114 = scmp.le.s32.totalorder 1, %s12
      %p115 = scmp.lt.s32.totalorder %s12, 3
      %p116 = pnand %p114, %p115
      %p117 = pneg %p116
      // Predicated region
      $region9: #{sublayer_connection.1} parent=5 // pred_check
        _
      $region10: #{sublayer_connection.1} parent=5 // pred_check_branch
        %119 = sbr.rel (%p116) target = $region12
      $region11: #{sublayer_connection.1} parent=5 // pred_region
        %s120 = ssub.s32 %s12, 1
        // Predicated region
        $region13: #{sublayer_connection.1} parent=11 // pred_check
          %p121 = pneg %p59
        $region14: #{sublayer_connection.1} parent=11 // pred_check_branch
          %123 = sbr.rel (%p121) target = $region16
        $region15: #{sublayer_connection.1} parent=11 // pred_region
          _
        $region16: #{sublayer_connection.1} parent=11 // pred_fallthru
          _
        // Predicated region
        $region17: #{sublayer_connection.1} parent=11 // pred_check
          %p124 = pneg %p80
        $region18: #{sublayer_connection.1} parent=11 // pred_check_branch
          %126 = sbr.rel (%p124) target = $region20
        $region19: #{sublayer_connection.1} parent=11 // pred_region
          _
        $region20: #{sublayer_connection.1} parent=11 // pred_fallthru
          _
      $region12: #{sublayer_connection.1} parent=5 // pred_fallthru
        _
      %p127 = scmp.lt.s32.totalorder %s12, 2
      // Predicated region
      $region21: #{sublayer_connection.1} parent=5 // pred_check
        %p128 = pneg %p127
      $region22: #{sublayer_connection.1} parent=5 // pred_check_branch
        %130 = sbr.rel (%p128) target = $region24
      $region23: #{sublayer_connection.1} parent=5 // pred_region
        // Predicated region
        $region25: #{sublayer_connection.1} parent=23 // pred_check
          %p131 = pneg %p32
        $region26: #{sublayer_connection.1} parent=23 // pred_check_branch
          %133 = sbr.rel (%p131) target = $region28
        $region27: #{sublayer_connection.1} parent=23 // pred_region
          %s134 = smul.u32 4, %s12
          %p135 = scmp.lt.s32.totalorder %s134, 7
          %s136 = scalar_select %p135, %s134, 7
          %s137 = smul.addr %s136, 8
          %s138 = scalar_lea.vmem %s0, %s137
          %s139 = smul.u32 4, %s12
        $region28: #{sublayer_connection.1} parent=23 // pred_fallthru
          _
      $region24: #{sublayer_connection.1} parent=5 // pred_fallthru
        _
      %p140 = scmp.le.s32.totalorder 1, %s12
      %p141 = scmp.lt.s32.totalorder %s12, 3
      %p142 = pnand %p140, %p141
      %p143 = pneg %p142
      // Predicated region
      $region29: #{sublayer_connection.1} parent=5 // pred_check
        _
      $region30: #{sublayer_connection.1} parent=5 // pred_check_branch
        %145 = sbr.rel (%p142) target = $region32
      $region31: #{sublayer_connection.1} parent=5 // pred_region
        %s146 = ssub.s32 %s12, 1
        %s147 = smul.u32 4, %s17
        %p148 = scmp.lt.s32.totalorder %s147, 7
        %s149 = scalar_select %p148, %s147, 7
        %s150 = smul.addr %s149, 8
        %s151 = scalar_lea.vmem %s0, %s150
        %p152 = pneg %p38
        %p153 = pneg %p35
        %p154 = pneg %p59
        %p155 = pneg %p56
        %p156 = pneg %p80
        %p157 = pneg %p77
        %p158 = pneg %p106
        %p159 = pneg %p103
        %s160 = sand.u32 %s93, 1
        %s161 = scalar_lea.sflag [#allocation3], %s160
        %s162 = sand.u32 %s93, 1
        %s163 = smul.addr %s162, 32
        %s164 = scalar_lea.vmem [#allocation2], %s163
        %s165 = smul.u32 4, %s17
        %p166 = scmp.lt.s32.totalorder %s165, 7
        %s167 = scalar_select %p166, %s165, 7
        %s168 = smul.addr %s167, 8
        %s169 = scalar_lea.vmem %s0, %s168
        %s170 = smul.u32 4, %s17
        %s171 = smul.u32 4, %s17
        %v172 = vld [vmem:[%s169] sm:$0xff]
        %v173 = vld [vmem:[%s169 + $0x8] sm:$0xff]
        %v174 = vld [vmem:[%s169 + $0x10] sm:$0xff]
        %v175 = vld [vmem:[%s169 + $0x18] sm:$0xff]
        %176 = vadd.xlane.f32.xlu0 %v172
        %v177 = vpop.xlane.xlu0 %176
        %178 = vadd.xlane.f32.xlu0 %v173
        %v179 = vpop.xlane.xlu0 %178
        %180 = vadd.xlane.f32.xlu0 %v174
        %v181 = vpop.xlane.xlu0 %180
        %182 = vadd.xlane.f32.xlu0 %v175
        %v183 = vpop.xlane.xlu0 %182
        %v184 = vrcp.pop 128.0
        %v185 = vmul.f32 %v177, %v184
        %v186 = vmul.f32 %v179, %v184
        %v187 = vmul.f32 %v181, %v184
        %v188 = vmul.f32 %v183, %v184
        %v189 = vsub.f32 %v172, %v185
        %v190 = vsub.f32 %v173, %v186
        %v191 = vsub.f32 %v174, %v187
        %v192 = vsub.f32 %v175, %v188
        %v193 = vmul.f32 %v189, %v189
        %v194 = vmul.f32 %v190, %v190
        %v195 = vmul.f32 %v191, %v191
        %v196 = vmul.f32 %v192, %v192
        %197 = vadd.xlane.f32.xlu0 %v193
        %v198 = vpop.xlane.xlu0 %197
        %199 = vadd.xlane.f32.xlu0 %v194
        %v200 = vpop.xlane.xlu0 %199
        %201 = vadd.xlane.f32.xlu0 %v195
        %v202 = vpop.xlane.xlu0 %201
        %203 = vadd.xlane.f32.xlu0 %v196
        %v204 = vpop.xlane.xlu0 %203
        %v205 = vmul.f32 %v198, %v184
        %v206 = vmul.f32 %v200, %v184
        %v207 = vmul.f32 %v202, %v184
        %v208 = vmul.f32 %v204, %v184
        %v209 = vadd.f32 %v205, 1e-05
        %v210 = vadd.f32 %v206, 1e-05
        %v211 = vadd.f32 %v207, 1e-05
        %v212 = vadd.f32 %v208, 1e-05
        %v213 = vrsqrt.pop %v209
        %v214 = vrsqrt.pop %v210
        %v215 = vrsqrt.pop %v211
        %v216 = vrsqrt.pop %v212
        %v217 = vmul.f32 %v189, %v213
        %v218 = vmul.f32 %v190, %v214
        %v219 = vmul.f32 %v191, %v215
        %v220 = vmul.f32 %v192, %v216
        %v221 = vld [vmem:[%s1] sm:$0xff]
        %v222 = vld [vmem:[%s1 + $0x8] sm:$0xff]
        %v223 = vld [vmem:[%s1 + $0x10] sm:$0xff]
        %v224 = vld [vmem:[%s1 + $0x18] sm:$0xff]
        %v225 = vld [vmem:[%s1 + $0x20] sm:$0xff]
        %v226 = vld [vmem:[%s1 + $0x28] sm:$0xff]
        %v227 = vld [vmem:[%s1 + $0x30] sm:$0xff]
        %v228 = vld [vmem:[%s1 + $0x38] sm:$0xff]
        %v229 = vld [vmem:[%s1 + $0x40] sm:$0xff]
        %v230 = vld [vmem:[%s1 + $0x48] sm:$0xff]
        %v231 = vld [vmem:[%s1 + $0x50] sm:$0xff]
        %v232 = vld [vmem:[%s1 + $0x58] sm:$0xff]
        %v233 = vld [vmem:[%s1 + $0x60] sm:$0xff]
        %v234 = vld [vmem:[%s1 + $0x68] sm:$0xff]
        %v235 = vld [vmem:[%s1 + $0x70] sm:$0xff]
        %v236 = vld [vmem:[%s1 + $0x78] sm:$0xff]
        %v237 = vld [vmem:[%s2] sm:$0x1]
        %v239 = vlaneseq
        %v240 = vshrl.u32 %v239, 7
        %v241 = vsub.s32 0, %v240
        %v242 = vrot.slane %v237, %v241
        %244 = vmatprep.subr.mxu0 0.0
        %245 = vmatpush1.msra.mxu0 %v221
        %246 = vmatprep.subr.mxu0 0.0
        %247 = vmatpush1.msra.mxu0 %v222
        %248 = vmatprep.subr.mxu0 0.0
        %249 = vmatpush1.msra.mxu0 %v223
        %250 = vmatprep.subr.mxu0 0.0
        %251 = vmatpush1.msra.mxu0 %v224
        %252 = vmatprep.subr.mxu0 0.0
        %253 = vmatpush1.msra.mxu0 %v225
        %254 = vmatprep.subr.mxu0 0.0
        %255 = vmatpush1.msra.mxu0 %v226
        %256 = vmatprep.subr.mxu0 0.0
        %257 = vmatpush1.msra.mxu0 %v227
        %258 = vmatprep.subr.mxu0 0.0
        %259 = vmatpush1.msra.mxu0 %v228
        %260 = vmatprep.subr.mxu0 0.0
        %261 = vmatpush1.msra.mxu0 %v229
        %262 = vmatprep.subr.mxu0 0.0
        %263 = vmatpush1.msra.mxu0 %v230
        %264 = vmatprep.subr.mxu0 0.0
        %265 = vmatpush1.msra.mxu0 %v231
        %266 = vmatprep.subr.mxu0 0.0
        %267 = vmatpush1.msra.mxu0 %v232
        %268 = vmatprep.subr.mxu0 0.0
        %269 = vmatpush1.msra.mxu0 %v233
        %270 = vmatprep.subr.mxu0 0.0
        %271 = vmatpush1.msra.mxu0 %v234
        %272 = vmatprep.subr.mxu0 0.0
        %273 = vmatpush1.msra.mxu0 %v235
        %274 = vmatprep.subr.mxu0 0.0
        %275 = vmatpush1.msra.mxu0 %v236
        %276 = vmatprep.subr.mxu0 0.0
        %277 = vmatpush1.msra.mxu0 0.0
        %278 = vmatprep.subr.mxu0 0.0
        %279 = vmatpush1.msra.mxu0 0.0
        %280 = vmatprep.subr.mxu0 0.0
        %281 = vmatpush1.msra.mxu0 0.0
        %282 = vmatprep.subr.mxu0 0.0
        %283 = vmatpush1.msra.mxu0 0.0
        %284 = vmatprep.subr.mxu0 0.0
        %285 = vmatpush1.msra.mxu0 0.0
        %286 = vmatprep.subr.mxu0 0.0
        %287 = vmatpush1.msra.mxu0 0.0
        %288 = vmatprep.subr.mxu0 0.0
        %289 = vmatpush1.msra.mxu0 0.0
        %290 = vmatprep.subr.mxu0 0.0
        %291 = vmatpush1.msra.mxu0 0.0
        %292 = vmatprep.subr.mxu0 0.0
        %293 = vmatpush1.msra.mxu0 0.0
        %294 = vmatprep.subr.mxu0 0.0
        %295 = vmatpush1.msra.mxu0 0.0
        %296 = vmatprep.subr.mxu0 0.0
        %297 = vmatpush1.msra.mxu0 0.0
        %298 = vmatprep.subr.mxu0 0.0
        %299 = vmatpush1.msra.mxu0 0.0
        %300 = vmatprep.subr.mxu0 0.0
        %301 = vmatpush1.msra.mxu0 0.0
        %302 = vmatprep.subr.mxu0 0.0
        %303 = vmatpush1.msra.mxu0 0.0
        %304 = vmatprep.subr.mxu0 0.0
        %305 = vmatpush1.msra.mxu0 0.0
        %306 = vmatprep.subr.mxu0 0.0
        %307 = vmatpush1.msra.mxu0 0.0
        %308 = vmatprep.mubr.f32.mxu0 0.0
        %309 = vmatmul.mubr.f32.gmra.mrb[0].mxu0 %v217
        %v310 = vpop.f32.mrb[0].mxu0
        %v311 = vadd.f32 %v242, %v310
        %v312 = vpop.f32.mrb[0].mxu0
        %313 = vmatprep.mubr.f32.mxu0 0.0
        %314 = vmatmul.mubr.f32.gmra.mrb[0].mxu0 %v218
        %v315 = vpop.f32.mrb[0].mxu0
        %v316 = vadd.f32 %v242, %v315
        %v317 = vpop.f32.mrb[0].mxu0
        %318 = vmatprep.mubr.f32.mxu0 0.0
        %319 = vmatmul.mubr.f32.gmra.mrb[0].mxu0 %v219
        %v320 = vpop.f32.mrb[0].mxu0
        %v321 = vadd.f32 %v242, %v320
        %v322 = vpop.f32.mrb[0].mxu0
        %323 = vmatprep.mubr.f32.mxu0 0.0
        %324 = vmatmul.mubr.f32.gmra.mrb[0].mxu0 %v220
        %v325 = vpop.f32.mrb[0].mxu0
        %v326 = vadd.f32 %v242, %v325
        %v327 = vpop.f32.mrb[0].mxu0
        %328 = vdwg.mxu0
        %v329 = vadd.f32 %v172, %v311
        %v330 = vadd.f32 %v173, %v316
        %v331 = vadd.f32 %v174, %v321
        %v332 = vadd.f32 %v175, %v326
        %333 = vst [vmem:[%s164] sm:$0xff] %v329
        %334 = vst [vmem:[%s164 + $0x8] sm:$0xff] %v330
        %335 = vst [vmem:[%s164 + $0x10] sm:$0xff] %v331
        %336 = vst [vmem:[%s164 + $0x18] sm:$0xff] %v332
        %s337 = sand.u32 %s93, 1
        %s338 = scalar_lea.sflag [#allocation3], %s337
        %s339 = sand.u32 %s93, 1
        %s340 = smul.addr %s339, 32
        %s341 = scalar_lea.vmem [#allocation2], %s340
        // Predicated region
        $region33: #{sublayer_connection.1} parent=31 // pred_check
          %p342 = pneg %p103
        $region34: #{sublayer_connection.1} parent=31 // pred_check_branch
          %344 = sbr.rel (%p342) target = $region36
        $region35: #{sublayer_connection.1} parent=31 // pred_region
          %s345 = smul.u32 4, %s17
          %s347 = ssub.s32 512, 512
          %348 = vsyncadd %s338, %s347
          %s349 = smul.addr %s345, 128
          %s350 = scalar_lea.hbm %s3, %s349
          %s351 = sshll.u32 %s341, 4
          %s352 = int_to_ptr.vmem [resolvable:$true] %s351
          %357 = dma.vmem_to_hbm [thread:$0]  %s352, 512, %s350, %s338, 128, 128, 8
        $region36: #{sublayer_connection.1} parent=31 // pred_fallthru
          _
      $region32: #{sublayer_connection.1} parent=5 // pred_fallthru
        _
      %p358 = scmp.le.s32.totalorder 2, %s12
      // Predicated region
      $region37: #{sublayer_connection.1} parent=5 // pred_check
        %p359 = pneg %p358
      $region38: #{sublayer_connection.1} parent=5 // pred_check_branch
        %361 = sbr.rel (%p359) target = $region40
      $region39: #{sublayer_connection.1} parent=5 // pred_region
        %s362 = ssub.s32 %s12, 2
        // Predicated region
        $region41: #{sublayer_connection.1} parent=39 // pred_check
          %p363 = pneg %p109
        $region42: #{sublayer_connection.1} parent=39 // pred_check_branch
          %365 = sbr.rel (%p363) target = $region44
        $region43: #{sublayer_connection.1} parent=39 // pred_region
          %s366 = sand.u32 %s94, 1
          %s367 = scalar_lea.sflag [#allocation3], %s366
          %s368 = sand.u32 %s94, 1
          %s369 = smul.addr %s368, 32
          %s370 = scalar_lea.vmem [#allocation2], %s369
          %371 = dma.done %s367, 512
        $region44: #{sublayer_connection.1} parent=39 // pred_fallthru
          _
      $region40: #{sublayer_connection.1} parent=5 // pred_fallthru
        _
    $region6: #{sublayer_connection.1} parent=1 // loop_footer
      %s16 = sadd.s32 1, %s12
    $region7: #{sublayer_connection.1} parent=1 // loop_footer_branch
      %11 = sbr.rel target = $region3
    $region8: #{sublayer_connection.1} parent=1 // loop_exit
      _
    %372 = vsyncpa [#allocation3], 1
    %s373 = scalar_lea.sflag [#allocation3], 1
    %374 = vsyncpa %s373, 1

</llo_original>
